<compile_context>
chip_gen: v7x
topology: tpu7x:2x2x1
jax: 0.10.0
libtpu: 0.0.40
codegen_flags: <defaults>
</compile_context>

<pallas_src>
import functools

import jax
import jax.numpy as jnp
from jax import lax
from jax.experimental import pallas as pl
from jax.experimental.pallas import tpu as pltpu


def _round_up(x, m):
    return ((x + m - 1) // m) * m


def logistic_regression_kernel(x_ref, w_ref, b_ref, out_ref, *, valid_n):
    # x_ref:   [TM, K]      float32 batch tile (streamed per grid step)
    # w_ref:   [N_pad, K]   PyTorch nn.Linear weight layout, zero-padded rows
    # b_ref:   [1, N_pad]   zero-padded bias
    # out_ref: [TM, N_pad]  lane-dense output tile
    x = x_ref[...]
    w = w_ref[...]

    # Linear: contract K of both operands directly on the MXU (f32 accumulate),
    # no in-kernel transpose of the [out, in]-layout weight.
    logits = lax.dot_general(
        x, w,
        dimension_numbers=(((1,), (1,)), ((), ())),
        preferred_element_type=jnp.float32,
    ) + b_ref[...]

    # ReLU
    h = jnp.maximum(logits, 0.0)

    # Row-wise softmax.  Padded columns have logits == 0 exactly, and all
    # valid ReLU outputs are >= 0, so the row max is unaffected by padding.
    _, n_pad = out_ref.shape
    m = jnp.max(h, axis=-1, keepdims=True)
    e = jnp.exp(h - m)
    denom = jnp.sum(e, axis=-1, keepdims=True)
    if valid_n != n_pad:
        # Analytic correction: each padded column contributes exp(0 - m) to
        # the row sum, so subtract (n_pad - valid_n) * exp(-m) instead of
        # materializing a (TM, N_pad) iota/compare/select mask.  Padded output
        # columns hold garbage but are sliced off in the wrapper.
        denom = denom - jnp.float32(n_pad - valid_n) * jnp.exp(-m)
    # Exact division (hides under DMA; restores exact row normalization).
    out_ref[...] = e / denom


def logistic_regression_forward(x, weight, bias, *, target_tm=1024):
    """x: [B, input_dim]; weight: [output_dim, input_dim]; bias: [output_dim]."""
    # PyTorch semantics: input_data.type(torch.FloatTensor)
    x = x.astype(jnp.float32)
    weight = weight.astype(jnp.float32)
    bias = bias.astype(jnp.float32)

    B, K = x.shape
    N = weight.shape[0]

    N_pad = _round_up(N, 128)          # lane-dense output stores
    B8 = _round_up(B, 8)               # sublane alignment for the batch tile

    # Adaptive batch tile:
    #  * aim for ~target_tm rows per grid step (amortizes per-step overhead),
    #  * keep >= 2 grid steps when there are >= 16 aligned rows so v7x can
    #    shard the "parallel" batch axis across both TensorCores,
    #  * pick tm near B8 / n_tiles so the round-up padding waste stays small.
    min_tiles = 2 if B8 >= 16 else 1
    n_tiles = max(pl.cdiv(B8, target_tm), min_tiles)
    tm = _round_up(pl.cdiv(B8, n_tiles), 8)
    B_pad = n_tiles * tm

    x_p = jnp.pad(x, ((0, B_pad - B), (0, 0)))
    w_p = jnp.pad(weight, ((0, N_pad - N), (0, 0)))
    b_p = jnp.pad(bias, (0, N_pad - N)).reshape(1, N_pad)

    kernel = functools.partial(logistic_regression_kernel, valid_n=N)

    # Explicit VMEM budget: double-buffered x/out tiles + (default
    # double-buffered) resident weight/bias, plus headroom.  Keeps large
    # tiles inside v5e's 16 MiB / v7x's 32 MiB scoped defaults.
    vmem_needed = 4 * (2 * tm * (K + N_pad) + 2 * (N_pad * K + N_pad))
    vmem_limit = int(min(100 << 20, max(vmem_needed + (2 << 20), 4 << 20)))

    out = pl.pallas_call(
        kernel,
        out_shape=jax.ShapeDtypeStruct((B_pad, N_pad), jnp.float32),
        grid=(n_tiles,),
        in_specs=[
            pl.BlockSpec((tm, K), lambda i: (i, 0)),       # streamed batch tiles
            pl.BlockSpec((N_pad, K), lambda i: (0, 0)),    # weight resident in VMEM
            pl.BlockSpec((1, N_pad), lambda i: (0, 0)),    # bias resident in VMEM
        ],
        out_specs=pl.BlockSpec((tm, N_pad), lambda i: (i, 0)),
        compiler_params=pltpu.CompilerParams(
            dimension_semantics=("parallel",),             # shard batch across TCs (v7x)
            vmem_limit_bytes=vmem_limit,
        ),
    )(x_p, w_p, b_p)

    return out[:B, :N]


if __name__ == "__main__":
    # Small shapes consistent with the module's forward: [B, input_dim]
    B, input_dim, output_dim = 8, 32, 16

    key = jax.random.PRNGKey(0)
    kx, kw, kb = jax.random.split(key, 3)

    # Deterministic parameter init (nn.Linear shapes: W [out, in], b [out])
    bound = 1.0 / (input_dim ** 0.5)
    weight = jax.random.uniform(kw, (output_dim, input_dim), jnp.float32,
                                minval=-bound, maxval=bound)
    bias = jax.random.uniform(kb, (output_dim,), jnp.float32,
                              minval=-bound, maxval=bound)

    x = jax.random.normal(kx, (B, input_dim), jnp.float32)

    prob = logistic_regression_forward(x, weight, bias)
    prob = jax.block_until_ready(prob)

    # Reference check in plain JAX.
    logits_ref = x @ weight.T + bias
    h_ref = jnp.maximum(logits_ref, 0.0)
    prob_ref = jax.nn.softmax(h_ref, axis=-1)
    assert prob.shape == (B, output_dim)
    assert jnp.allclose(prob, prob_ref, atol=1e-3, rtol=1e-3), "mismatch vs reference"
    assert jnp.allclose(jnp.sum(prob, axis=-1), 1.0, atol=1e-4), "rows must sum to 1"

    print("KERNEL_OK")
</pallas_src>

<mosaic_0001>
module attributes {stable_mosaic.version = 11 : i64} {
  func.func @logistic_regression_kernel(%arg0: i32, %arg1: memref<8x32xf32, #tpu.memory_space<vmem>>, %arg2: memref<128x32xf32, #tpu.memory_space<vmem>>, %arg3: memref<1x128xf32, #tpu.memory_space<vmem>>, %arg4: memref<8x128xf32, #tpu.memory_space<vmem>>) attributes {dimension_semantics = [#tpu.dimension_semantics<parallel>], iteration_bounds = array<i64: 1>, scalar_prefetch = 0 : i64, scratch_operands = 0 : i64, tpu.core_type = #tpu.core_type<tc>, window_params = [{transform_indices = @transform_0, window_bounds = array<i64: 8, 32>}, {pipeline_mode = #tpu.pipeline_mode<synchronous>, transform_indices = @transform_1, window_bounds = array<i64: 128, 32>}, {pipeline_mode = #tpu.pipeline_mode<synchronous>, transform_indices = @transform_2, window_bounds = array<i64: 1, 128>}, {transform_indices = @transform_3, window_bounds = array<i64: 8, 128>}]} {
    %c0 = arith.constant 0 : index
    %c0_0 = arith.constant 0 : index
    %0 = vector.load %arg1[%c0, %c0_0] : memref<8x32xf32, #tpu.memory_space<vmem>>, vector<8x32xf32>
    %c0_1 = arith.constant 0 : index
    %c0_2 = arith.constant 0 : index
    %1 = vector.load %arg2[%c0_1, %c0_2] : memref<128x32xf32, #tpu.memory_space<vmem>>, vector<128x32xf32>
    %cst = arith.constant dense<0.000000e+00> : vector<8x128xf32>
    %2 = tpu.matmul %0, %1, %cst {dimension_numbers = #tpu.dot_dimension_numbers<[1], [1], [0], [0], [0, 0, 1, 0], [], []>} : vector<8x32xf32>, vector<128x32xf32>, vector<8x128xf32> -> vector<8x128xf32>
    %c0_3 = arith.constant 0 : index
    %c0_4 = arith.constant 0 : index
    %3 = vector.load %arg3[%c0_3, %c0_4] : memref<1x128xf32, #tpu.memory_space<vmem>>, vector<1x128xf32>
    %4 = vector.broadcast %3 : vector<1x128xf32> to vector<8x128xf32>
    %5 = arith.addf %2, %4 : vector<8x128xf32>
    %cst_5 = arith.constant 0.000000e+00 : f32
    %6 = vector.broadcast %cst_5 : f32 to vector<8x128xf32>
    %7 = arith.maximumf %5, %6 : vector<8x128xf32>
    %cst_6 = arith.constant dense<0xFF800000> : vector<8xf32>
    %8 = vector.multi_reduction <maximumf>, %7, %cst_6 [1] : vector<8x128xf32> to vector<8xf32>
    %9 = vector.shape_cast %8 : vector<8xf32> to vector<8x1xf32>
    %10 = vector.broadcast %9 : vector<8x1xf32> to vector<8x128xf32>
    %11 = arith.subf %7, %10 : vector<8x128xf32>
    %12 = math.exp %11 : vector<8x128xf32>
    %cst_7 = arith.constant dense<0.000000e+00> : vector<8xf32>
    %13 = vector.multi_reduction <add>, %12, %cst_7 [1] : vector<8x128xf32> to vector<8xf32>
    %14 = vector.shape_cast %13 : vector<8xf32> to vector<8x1xf32>
    %cst_8 = arith.constant 0.000000e+00 : f32
    %15 = vector.broadcast %cst_8 : f32 to vector<8x1xf32>
    %16 = arith.subf %15, %9 : vector<8x1xf32>
    %17 = math.exp %16 : vector<8x1xf32>
    %cst_9 = arith.constant 1.120000e+02 : f32
    %18 = vector.broadcast %cst_9 : f32 to vector<8x1xf32>
    %19 = arith.mulf %18, %17 : vector<8x1xf32>
    %20 = arith.subf %14, %19 : vector<8x1xf32>
    %21 = vector.broadcast %20 : vector<8x1xf32> to vector<8x128xf32>
    %22 = arith.divf %12, %21 : vector<8x128xf32>
    %c0_10 = arith.constant 0 : index
    %c0_11 = arith.constant 0 : index
    %23 = vector.load %arg4[%c0_10, %c0_11] : memref<8x128xf32, #tpu.memory_space<vmem>>, vector<8x128xf32>
    tpu.vector_store %arg4[%c0_10, %c0_11], %22 {strides = array<i32>} : memref<8x128xf32, #tpu.memory_space<vmem>>, vector<8x128xf32>,
    return
  }
  func.func @transform_0(%arg0: i32) -> (i32, i32) {
    %c0_i32 = arith.constant 0 : i32
    %c0_i32_0 = arith.constant 0 : i32
    return %arg0, %c0_i32 : i32, i32
  }
  func.func @transform_1(%arg0: i32) -> (i32, i32) {
    %c0_i32 = arith.constant 0 : i32
    %c0_i32_0 = arith.constant 0 : i32
    %c0_i32_1 = arith.constant 0 : i32
    return %c0_i32, %c0_i32_0 : i32, i32
  }
  func.func @transform_2(%arg0: i32) -> (i32, i32) {
    %c0_i32 = arith.constant 0 : i32
    %c0_i32_0 = arith.constant 0 : i32
    %c0_i32_1 = arith.constant 0 : i32
    return %c0_i32, %c0_i32_0 : i32, i32
  }
  func.func @transform_3(%arg0: i32) -> (i32, i32) {
    %c0_i32 = arith.constant 0 : i32
    %c0_i32_0 = arith.constant 0 : i32
    return %arg0, %c0_i32 : i32, i32
  }
}

</mosaic_0001>

<llo_original>
// kernel: tpu_custom_call.1
$region0: #{tpu_custom_call.1}
  #allocation0 [shape = 'u32[]', space=smem, size = 0x4, offset = 0x4, fixed_abs, tag = 'smem constant byte address 0x4 - core index']
  #allocation1 [shape = 'u32[144,128]{1,0:T(1,128)}', space=vmem, size = 0x12000, scoped, tag = 'internal scratch']
  %s0 = inlined_call_operand.vmem [shape: f32[8,32], index: 0, kind: input, shape index: {}]
  %s1 = inlined_call_operand.vmem [shape: f32[128,32], index: 1, kind: input, shape index: {}]
  %s2 = inlined_call_operand.vmem [shape: f32[1,128], index: 2, kind: input, shape index: {}]
  %s3 = inlined_call_operand.hbm [shape: f32[8,128], index: 3, kind: output, shape index: {}]
  %s4 = sld [smem:[#allocation0]]
  $region22: #{tpu_custom_call.1} parent=0
    _
  %s6 = ssub.s32 1, %s4
  %s7 = scalar_select 0, %s6, %s4
  $region1: #{tpu_custom_call.1} parent=0
    #allocation2 [shape = 'u8[4096]{0}', space=vmem, size = 0x1000, scoped, tag = 'output window, operand 0, single buffered']
    #allocation3 [shape = 's32[1]{0}', space=sflag, size = 0x4, scoped, tag = 'scoped memory for tpu_custom_call.1']
    %8 = vsyncpa [#allocation3], 0
    // Predicated region
    $region2: #{tpu_custom_call.1} parent=1 // pred_check
      _
    $region3: #{tpu_custom_call.1} parent=1 // pred_check_branch
      %10 = sbr.rel (0) target = $region5
    $region4: #{tpu_custom_call.1} parent=1 // pred_region
      _
    $region5: #{tpu_custom_call.1} parent=1 // pred_fallthru
      _
    // Predicated region
    $region6: #{tpu_custom_call.1} parent=1 // pred_check
      _
    $region7: #{tpu_custom_call.1} parent=1 // pred_check_branch
      %12 = sbr.rel (0) target = $region9
    $region8: #{tpu_custom_call.1} parent=1 // pred_region
      _
    $region9: #{tpu_custom_call.1} parent=1 // pred_fallthru
      _
    // Predicated region
    $region10: #{tpu_custom_call.1} parent=1 // pred_check
      _
    $region11: #{tpu_custom_call.1} parent=1 // pred_check_branch
      %14 = sbr.rel (0) target = $region13
    $region12: #{tpu_custom_call.1} parent=1 // pred_region
      _
    $region13: #{tpu_custom_call.1} parent=1 // pred_fallthru
      _
    %v15 = vld [vmem:[%s0] sm:$0xff]
    %v16 = vld [vmem:[%s1] sm:$0xff]
    %v17 = vld [vmem:[%s1 + $0x8] sm:$0xff]
    %v18 = vld [vmem:[%s1 + $0x10] sm:$0xff]
    %v19 = vld [vmem:[%s1 + $0x18] sm:$0xff]
    %v20 = vld [vmem:[%s1 + $0x20] sm:$0xff]
    %v21 = vld [vmem:[%s1 + $0x28] sm:$0xff]
    %v22 = vld [vmem:[%s1 + $0x30] sm:$0xff]
    %v23 = vld [vmem:[%s1 + $0x38] sm:$0xff]
    %v24 = vld [vmem:[%s1 + $0x40] sm:$0xff]
    %v25 = vld [vmem:[%s1 + $0x48] sm:$0xff]
    %v26 = vld [vmem:[%s1 + $0x50] sm:$0xff]
    %v27 = vld [vmem:[%s1 + $0x58] sm:$0xff]
    %v28 = vld [vmem:[%s1 + $0x60] sm:$0xff]
    %v29 = vld [vmem:[%s1 + $0x68] sm:$0xff]
    %v30 = vld [vmem:[%s1 + $0x70] sm:$0xff]
    %v31 = vld [vmem:[%s1 + $0x78] sm:$0xff]
    %v32 = vld [vmem:[%s2] sm:$0x1]
    %v34 = vlaneseq
    %v35 = vshrl.u32 %v34, 7
    %v36 = vsub.s32 0, %v35
    %v37 = vrot.slane %v32, %v36
    %vm39 = vcmask 261120
    %v41 = vsel %vm39, %v15, 0
    %v44 = vsel %vm39, %v16, 0
    %v47 = vsel %vm39, %v17, 0
    %v50 = vsel %vm39, %v18, 0
    %v53 = vsel %vm39, %v19, 0
    %v56 = vsel %vm39, %v20, 0
    %v59 = vsel %vm39, %v21, 0
    %v62 = vsel %vm39, %v22, 0
    %v65 = vsel %vm39, %v23, 0
    %v68 = vsel %vm39, %v24, 0
    %v71 = vsel %vm39, %v25, 0
    %v74 = vsel %vm39, %v26, 0
    %v77 = vsel %vm39, %v27, 0
    %v80 = vsel %vm39, %v28, 0
    %v83 = vsel %vm39, %v29, 0
    %v86 = vsel %vm39, %v30, 0
    %v89 = vsel %vm39, %v31, 0
    %91 = vmatprep.subr.mxu0 0.0
    %92 = vmatpush1.xpose.msra.mxu0 %v44
    %93 = vmatprep.subr.mxu0 0.0
    %94 = vmatpush1.xpose.msra.mxu0 %v47
    %95 = vmatprep.subr.mxu0 0.0
    %96 = vmatpush1.xpose.msra.mxu0 %v50
    %97 = vmatprep.subr.mxu0 0.0
    %98 = vmatpush1.xpose.msra.mxu0 %v53
    %99 = vmatprep.subr.mxu0 0.0
    %100 = vmatpush1.xpose.msra.mxu0 %v56
    %101 = vmatprep.subr.mxu0 0.0
    %102 = vmatpush1.xpose.msra.mxu0 %v59
    %103 = vmatprep.subr.mxu0 0.0
    %104 = vmatpush1.xpose.msra.mxu0 %v62
    %105 = vmatprep.subr.mxu0 0.0
    %106 = vmatpush1.xpose.msra.mxu0 %v65
    %107 = vmatprep.subr.mxu0 0.0
    %108 = vmatpush1.xpose.msra.mxu0 %v68
    %109 = vmatprep.subr.mxu0 0.0
    %110 = vmatpush1.xpose.msra.mxu0 %v71
    %111 = vmatprep.subr.mxu0 0.0
    %112 = vmatpush1.xpose.msra.mxu0 %v74
    %113 = vmatprep.subr.mxu0 0.0
    %114 = vmatpush1.xpose.msra.mxu0 %v77
    %115 = vmatprep.subr.mxu0 0.0
    %116 = vmatpush1.xpose.msra.mxu0 %v80
    %117 = vmatprep.subr.mxu0 0.0
    %118 = vmatpush1.xpose.msra.mxu0 %v83
    %119 = vmatprep.subr.mxu0 0.0
    %120 = vmatpush1.xpose.msra.mxu0 %v86
    %121 = vmatprep.subr.mxu0 0.0
    %122 = vmatpush1.xpose.msra.mxu0 %v89
    %123 = vmatprep.subr.mxu0 0.0
    %124 = vmatpush1.xpose.msra.mxu0 0.0
    %125 = vmatprep.subr.mxu0 0.0
    %126 = vmatpush1.xpose.msra.mxu0 0.0
    %127 = vmatprep.subr.mxu0 0.0
    %128 = vmatpush1.xpose.msra.mxu0 0.0
    %129 = vmatprep.subr.mxu0 0.0
    %130 = vmatpush1.xpose.msra.mxu0 0.0
    %131 = vmatprep.subr.mxu0 0.0
    %132 = vmatpush1.xpose.msra.mxu0 0.0
    %133 = vmatprep.subr.mxu0 0.0
    %134 = vmatpush1.xpose.msra.mxu0 0.0
    %135 = vmatprep.subr.mxu0 0.0
    %136 = vmatpush1.xpose.msra.mxu0 0.0
    %137 = vmatprep.subr.mxu0 0.0
    %138 = vmatpush1.xpose.msra.mxu0 0.0
    %139 = vmatprep.subr.mxu0 0.0
    %140 = vmatpush1.xpose.msra.mxu0 0.0
    %141 = vmatprep.subr.mxu0 0.0
    %142 = vmatpush1.xpose.msra.mxu0 0.0
    %143 = vmatprep.subr.mxu0 0.0
    %144 = vmatpush1.xpose.msra.mxu0 0.0
    %145 = vmatprep.subr.mxu0 0.0
    %146 = vmatpush1.xpose.msra.mxu0 0.0
    %147 = vmatprep.subr.mxu0 0.0
    %148 = vmatpush1.xpose.msra.mxu0 0.0
    %149 = vmatprep.subr.mxu0 0.0
    %150 = vmatpush1.xpose.msra.mxu0 0.0
    %151 = vmatprep.subr.mxu0 0.0
    %152 = vmatpush1.xpose.msra.mxu0 0.0
    %153 = vmatprep.subr.mxu0 0.0
    %154 = vmatpush1.xpose.msra.mxu0 0.0
    %155 = vmatprep.mubr.f32.mxu0 0.0
    %156 = vmatmul.mubr.f32.gmra.mrb[0].mxu0 %v41
    %v157 = vpop.f32.mrb[0].mxu0
    %v158 = vadd.f32 %v37, %v157
    %v159 = vpop.f32.mrb[0].mxu0
    %160 = vdwg.mxu0
    %v161 = vmax.f32 %v158, 0.0
    %162 = vmax.xlane.f32.xlu0 %v161
    %v163 = vpop.xlane.xlu0 %162
    %v164 = vsub.f32 %v161, %v163
    %v165 = vmul.f32 %v164, 1.442695
    %v166 = vpow.pop %v165
    %167 = vadd.xlane.f32.xlu0 %v166
    %v168 = vpop.xlane.xlu0 %167
    %v169 = vsub.f32 0.0, %v163
    %v170 = vmul.f32 %v169, 1.442695
    %v171 = vpow.pop %v170
    %v172 = vmul.f32 %v171, 112.0
    %v173 = vsub.f32 %v168, %v172
    %v174 = vrcp.pop %v173
    %v175 = vmul.f32 %v166, %v174
    %176 = vst [vmem:[#allocation2] sm:$0xff] %v175
    // Predicated region
    $region14: #{tpu_custom_call.1} parent=1 // pred_check
      _
    $region15: #{tpu_custom_call.1} parent=1 // pred_check_branch
      %178 = sbr.rel (0) target = $region17
    $region16: #{tpu_custom_call.1} parent=1 // pred_region
      %s180 = ssub.s32 128, 128
      %181 = vsyncadd [#allocation3], %s180
      %s183 = sshll.u32 [#allocation2], 4
      %s184 = int_to_ptr.vmem [resolvable:$true] %s183
      %186 = dma.vmem_to_hbm [thread:$0]  %s184, 128, %s3, [#allocation3]
    $region17: #{tpu_custom_call.1} parent=1 // pred_fallthru
      _
    // Predicated region
    $region18: #{tpu_custom_call.1} parent=1 // pred_check
      _
    $region19: #{tpu_custom_call.1} parent=1 // pred_check_branch
      %188 = sbr.rel (0) target = $region21
    $region20: #{tpu_custom_call.1} parent=1 // pred_region
      %189 = dma.done [#allocation3], 128
    $region21: #{tpu_custom_call.1} parent=1 // pred_fallthru
      _
    %190 = vsyncpa [#allocation3], 1

</llo_original>
